<compile_context>
chip_gen: v5e
topology: v5e:2x2
jax: 0.10.0
libtpu: 0.0.40
codegen_flags: <defaults>
</compile_context>

<pallas_src>
import functools

import jax
import jax.numpy as jnp
from jax.experimental import pallas as pl
from jax.experimental.pallas import tpu as pltpu


def _rcab_kernel(x_ref, top_ref, bot_ref, wdw_ref, wg_ref, b_ref, out_ref, *,
                 res_scale, c, group):
    # x_ref   : (1, TH, WC)   current row tile, merged (w, c) lane layout
    # top_ref : (1, 8, WC)    8-row block containing the row just above the tile (clamped)
    # bot_ref : (1, 8, WC)    8-row block containing the row just below the tile (clamped)
    # wdw_ref : (3, 3, WC)    depthwise 3x3 weights broadcast over W (f32)
    # wg_ref  : (G, G)        grouped block-diagonal 1x1-conv weights (bf16), G = group
    # b_ref   : (1, WC)       1x1-conv bias broadcast over W (f32)
    r = pl.program_id(1)
    last_r = pl.num_programs(1) - 1
    th = x_ref.shape[1]
    wc = x_ref.shape[2]

    x = x_ref[0].astype(jnp.float32)                               # (TH, WC)

    # Halo rows.  At the image top/bottom the clamped index_map fetched an in-image
    # block; the select below replaces it with the tile's own edge row (replicate pad).
    top_row = jnp.where(r == 0, x[0:1, :],
                        top_ref[0, 7:8, :].astype(jnp.float32))    # (1, WC)
    bot_row = jnp.where(r == last_r, x[th - 1:th, :],
                        bot_ref[0, 0:1, :].astype(jnp.float32))    # (1, WC)

    # Row-shifted views via sublane rotation (XLU slot) + a one-row fix-up.
    # pltpu.roll follows jnp.roll semantics: roll(x, s, 0)[i] == x[i - s].
    rid = jax.lax.broadcasted_iota(jnp.int32, (th, wc), 0)
    lid = jax.lax.broadcasted_iota(jnp.int32, (th, wc), 1)
    row_up = jnp.where(rid == 0, top_row, pltpu.roll(x, 1, 0))            # x[i-1]
    row_dn = jnp.where(rid == th - 1, bot_row, pltpu.roll(x, th - 1, 0))  # x[i+1]

    # Depthwise 3x3: for each row variant, lane-rotate by +/- C (pixel w-1 / w+1) with
    # replicate padding at the image sides, multiply by the broadcast tap weight.
    # (Taps are computed in f32 for parity with the PyTorch module; on bf16-capable
    #  VALU chips (v6e/v7x) this elementwise path could run in bf16.)
    wdw = wdw_ref[...].astype(jnp.float32)                         # (3, 3, WC)
    rows = (row_up, x, row_dn)                                     # ky = 0, 1, 2
    acc = None
    for ky in range(3):
        base = rows[ky]
        left = jnp.where(lid < c, base, pltpu.roll(base, c, 1))              # pixel w-1
        right = jnp.where(lid >= wc - c, base, pltpu.roll(base, wc - c, 1))  # pixel w+1
        cols = (left, base, right)                                 # kx = 0, 1, 2
        for kx in range(3):
            term = cols[kx] * wdw[ky, kx:kx + 1, :]
            acc = term if acc is None else acc + term              # first tap inits acc

    # Pointwise 1x1 conv as a block-diagonal matmul over fixed lane groups.
    # bf16 MXU inputs, f32 accumulation (deliberate precision trade-off).
    acc_bf16 = acc.astype(jnp.bfloat16)
    wg = wg_ref[...]
    if wc == group:
        y = jnp.dot(acc_bf16, wg, preferred_element_type=jnp.float32)
    else:
        parts = []
        for gi in range(wc // group):
            sl = slice(gi * group, (gi + 1) * group)               # 128/256-aligned lanes
            parts.append(jnp.dot(acc_bf16[:, sl], wg,
                                 preferred_element_type=jnp.float32))
        y = jnp.concatenate(parts, axis=1)

    y = y + b_ref[...].astype(jnp.float32)
    y = y * jax.nn.sigmoid(y)                                      # SiLU
    out_ref[0] = (y * res_scale + x).astype(out_ref.dtype)


def _pick_tile_h(h, wc, in_itemsize, group, budget_bytes=20 << 20):
    """Largest multiple-of-8 divisor of h whose working set fits the VMEM budget.

    Accounts for double-buffered streamed tiles (input + output), the two 8-row halo
    blocks, the resident constants (grouped 1x1 weight, depthwise taps, bias) and ~8
    live f32 (TH, WC) intermediates inside the kernel body, so large tiles do not
    spill / OOM on v7x (64 MiB VMEM, 32 MiB scoped default).
    """
    const_bytes = 2 * (group * group * 2 + 9 * wc * 4 + wc * 4)
    best = 8
    for th in range(8, h + 1, 8):
        if h % th:
            continue
        stream = 2 * 2 * th * wc * in_itemsize       # in + out row tiles, double-buffered
        halos = 2 * 2 * 8 * wc * in_itemsize         # top + bot blocks, double-buffered
        interm = 8 * th * wc * 4                     # live f32 temporaries in the body
        if stream + halos + interm + const_bytes <= budget_bytes:
            best = th
    return best


def prepare_rcab_params(w_dw, w_pw, b_pw, W):
    """Host-side weight prep.  Call once per weight set and reuse the result.

    w_dw : (C, 1, 3, 3) depthwise conv weight (groups=C, no bias)
    w_pw : (C, C, 1, 1) 1x1 conv weight
    b_pw : (C,)         1x1 conv bias
    W    : image width
    """
    C = w_dw.shape[0]
    WC = W * C
    wdw = jnp.transpose(w_dw[:, 0, :, :], (1, 2, 0))               # (3, 3, C)
    wdw_m = jnp.tile(wdw, (1, 1, W)).astype(jnp.float32)           # (3, 3, W*C)
    w1 = jnp.transpose(w_pw[:, :, 0, 0], (1, 0))                   # (Cin, Cout)

    # Fixed lane group for the 1x1 matmul: 256 fills the v6e/v7x 256x256 MXU, 128
    # natively matches v5e; fall back to the full width only if neither divides W*C.
    group = WC
    for g in (256, 128):
        if WC % g == 0 and g % C == 0:
            group = g
            break
    w_g = jnp.kron(jnp.eye(group // C, dtype=w1.dtype), w1).astype(jnp.bfloat16)
    b_m = jnp.tile(b_pw, (W,)).reshape(1, WC).astype(jnp.float32)
    return wdw_m, w_g, b_m, group


def rcab_block(x_nchw, w_dw, w_pw, b_pw, res_scale=1.0, tile_h=None, params=None):
    """Block.forward for conv='D', k_size=3, dilation=1 (RCAB body + residual).

    x_nchw: (B, C, H, W) in PyTorch layout.  Pass `params = prepare_rcab_params(...)`
    to avoid re-building the derived weights on every call.
    """
    B, C, H, W = x_nchw.shape
    if H % 8 != 0:
        raise ValueError("H must be a multiple of 8 for the row-tiled kernel")
    if W < 2:
        raise ValueError("W must be >= 2")
    WC = W * C
    # TODO(synk): for shapes where W*C is not a multiple of 128, pad C (or tile W in
    # the grid) so output stores stay lane-dense; the kernel is correct without it.

    if params is None:
        params = prepare_rcab_params(w_dw, w_pw, b_pw, W)
    wdw_m, w_g, b_m, group = params

    # NHWC with (w, c) merged onto the lane axis (free reshape after the transpose).
    x = jnp.transpose(x_nchw, (0, 2, 3, 1)).reshape(B, H, WC)

    if tile_h is None:
        tile_h = _pick_tile_h(H, WC, x.dtype.itemsize, group)
    assert tile_h % 8 == 0 and H % tile_h == 0

    n_row_tiles = H // tile_h
    th8 = tile_h // 8
    n_blk8 = H // 8

    kernel = functools.partial(_rcab_kernel, res_scale=float(res_scale), c=C,
                               group=group)

    out = pl.pallas_call(
        kernel,
        out_shape=jax.ShapeDtypeStruct((B, H, WC), x.dtype),
        grid=(B, n_row_tiles),
        in_specs=[
            # current row tile
            pl.BlockSpec((1, tile_h, WC), lambda b, r: (b, r, 0)),
            # 8-row block holding the row just above the tile (clamped at the top)
            pl.BlockSpec((1, 8, WC),
                         lambda b, r: (b, jnp.maximum(r * th8 - 1, 0), 0)),
            # 8-row block holding the row just below the tile (clamped at the bottom)
            pl.BlockSpec((1, 8, WC),
                         lambda b, r: (b, jnp.minimum((r + 1) * th8, n_blk8 - 1), 0)),
            # constants (index maps never change; kept resident across the grid)
            pl.BlockSpec((3, 3, WC), lambda b, r: (0, 0, 0)),
            pl.BlockSpec((group, group), lambda b, r: (0, 0)),
            pl.BlockSpec((1, WC), lambda b, r: (0, 0)),
        ],
        out_specs=pl.BlockSpec((1, tile_h, WC), lambda b, r: (b, r, 0)),
        compiler_params=pltpu.CompilerParams(
            dimension_semantics=("parallel", "parallel"),
            vmem_limit_bytes=32 * 1024 * 1024,
        ),
    )(x, x, x, wdw_m, w_g, b_m)

    return jnp.transpose(out.reshape(B, H, W, C), (0, 3, 1, 2))    # back to NCHW


def rcab_block_ref(x_nchw, w_dw, w_pw, b_pw, res_scale=1.0):
    """Pure-JAX f32 reference (same math, no Pallas) for correctness checking."""
    x = jnp.transpose(x_nchw, (0, 2, 3, 1)).astype(jnp.float32)
    B, H, W, C = x.shape
    xp = jnp.pad(x, ((0, 0), (1, 1), (1, 1), (0, 0)), mode="edge")
    wdw = jnp.transpose(w_dw[:, 0, :, :], (1, 2, 0)).astype(jnp.float32)
    acc = jnp.zeros_like(x)
    for dy in range(3):
        for dx in range(3):
            acc = acc + xp[:, dy:dy + H, dx:dx + W, :] * wdw[dy, dx]
    y = acc @ jnp.transpose(w_pw[:, :, 0, 0], (1, 0)).astype(jnp.float32)
    y = y + b_pw.astype(jnp.float32)
    y = y * jax.nn.sigmoid(y)
    out = y * res_scale + x
    return jnp.transpose(out, (0, 3, 1, 2))


if __name__ == "__main__":
    B, C, H, W = 2, 8, 16, 16            # W*C = 128 -> fully lane-dense output stores
    res_scale = 1.0

    key = jax.random.PRNGKey(0)
    k_x, k_dw, k_pw, k_b = jax.random.split(key, 4)

    x = jax.random.normal(k_x, (B, C, H, W), dtype=jnp.float32)
    w_dw = jax.random.normal(k_dw, (C, 1, 3, 3), dtype=jnp.float32) * 0.2
    w_pw = jax.random.normal(k_pw, (C, C, 1, 1), dtype=jnp.float32) * 0.2
    b_pw = jax.random.normal(k_b, (C,), dtype=jnp.float32) * 0.1

    params = prepare_rcab_params(w_dw, w_pw, b_pw, W)   # built once, reused per call
    ref = rcab_block_ref(x, w_dw, w_pw, b_pw, res_scale)

    # Default tiling: single 16-row tile per image (largest tile the VMEM budget allows).
    out = jax.block_until_ready(
        rcab_block(x, w_dw, w_pw, b_pw, res_scale, params=params))
    assert out.shape == (B, C, H, W)
    # 1x1 conv runs with bf16 MXU inputs (f32 accumulate) -> bf16-level tolerance.
    assert jnp.allclose(out, ref, atol=3e-2, rtol=3e-2), "mismatch (default tiling)"

    # Multi-tile path: exercises the interior halo blocks as well as replicate padding.
    out8 = jax.block_until_ready(
        rcab_block(x, w_dw, w_pw, b_pw, res_scale, tile_h=8, params=params))
    assert jnp.allclose(out8, ref, atol=3e-2, rtol=3e-2), "mismatch (tile_h=8)"

    print("KERNEL_OK")
</pallas_src>

<mosaic_0001>
module attributes {stable_mosaic.version = 11 : i64} {
  func.func @_rcab_kernel(%arg0: i32, %arg1: i32, %arg2: memref<1x16x128xf32, #tpu.memory_space<vmem>>, %arg3: memref<1x8x128xf32, #tpu.memory_space<vmem>>, %arg4: memref<1x8x128xf32, #tpu.memory_space<vmem>>, %arg5: memref<3x3x128xf32, #tpu.memory_space<vmem>>, %arg6: memref<128x128xbf16, #tpu.memory_space<vmem>>, %arg7: memref<1x128xf32, #tpu.memory_space<vmem>>, %arg8: memref<1x16x128xf32, #tpu.memory_space<vmem>>) attributes {dimension_semantics = [#tpu.dimension_semantics<parallel>, #tpu.dimension_semantics<parallel>], iteration_bounds = array<i64: 2, 1>, scalar_prefetch = 0 : i64, scratch_operands = 0 : i64, tpu.core_type = #tpu.core_type<tc>, window_params = [{transform_indices = @transform_0, window_bounds = array<i64: 1, 16, 128>}, {transform_indices = @transform_1, window_bounds = array<i64: 1, 8, 128>}, {transform_indices = @transform_2, window_bounds = array<i64: 1, 8, 128>}, {pipeline_mode = #tpu.pipeline_mode<synchronous>, transform_indices = @transform_3, window_bounds = array<i64: 3, 3, 128>}, {pipeline_mode = #tpu.pipeline_mode<synchronous>, transform_indices = @transform_4, window_bounds = array<i64: 128, 128>}, {pipeline_mode = #tpu.pipeline_mode<synchronous>, transform_indices = @transform_5, window_bounds = array<i64: 1, 128>}, {transform_indices = @transform_6, window_bounds = array<i64: 1, 16, 128>}]} {
    %c0 = arith.constant 0 : index
    %c0_0 = arith.constant 0 : index
    %c0_1 = arith.constant 0 : index
    %0 = vector.load %arg2[%c0, %c0_0, %c0_1] : memref<1x16x128xf32, #tpu.memory_space<vmem>>, vector<1x16x128xf32>
    %1 = vector.shape_cast %0 : vector<1x16x128xf32> to vector<16x128xf32>
    %c0_i32 = arith.constant 0 : i32
    %2 = arith.cmpi eq, %arg1, %c0_i32 : i32
    %3 = vector.extract_strided_slice %1 {offsets = [0, 0], sizes = [1, 128], strides = [1, 1]} : vector<16x128xf32> to vector<1x128xf32>
    %c0_2 = arith.constant 0 : index
    %c7 = arith.constant 7 : index
    %c0_3 = arith.constant 0 : index
    %4 = vector.load %arg3[%c0_2, %c7, %c0_3] : memref<1x8x128xf32, #tpu.memory_space<vmem>>, vector<1x1x128xf32>
    %5 = vector.shape_cast %4 : vector<1x1x128xf32> to vector<1x128xf32>
    %6 = arith.select %2, %3, %5 : vector<1x128xf32>
    %c0_i32_4 = arith.constant 0 : i32
    %7 = arith.cmpi eq, %arg1, %c0_i32_4 : i32
    %8 = vector.extract_strided_slice %1 {offsets = [15, 0], sizes = [1, 128], strides = [1, 1]} : vector<16x128xf32> to vector<1x128xf32>
    %c0_5 = arith.constant 0 : index
    %c0_6 = arith.constant 0 : index
    %c0_7 = arith.constant 0 : index
    %9 = vector.load %arg4[%c0_5, %c0_6, %c0_7] : memref<1x8x128xf32, #tpu.memory_space<vmem>>, vector<1x1x128xf32>
    %10 = vector.shape_cast %9 : vector<1x1x128xf32> to vector<1x128xf32>
    %11 = arith.select %7, %8, %10 : vector<1x128xf32>
    %12 = tpu.iota {dimensions = array<i32: 0>} : vector<16x128xi32>
    %13 = tpu.iota {dimensions = array<i32: 1>} : vector<16x128xi32>
    %c0_i32_8 = arith.constant 0 : i32
    %14 = vector.broadcast %c0_i32_8 : i32 to vector<16x128xi32>
    %15 = arith.cmpi eq, %12, %14 : vector<16x128xi32>
    %c1_i32 = arith.constant 1 : i32
    %16 = tpu.dynamic_rotate %1 by %c1_i32 dim 0 : vector<16x128xf32>, i32 -> vector<16x128xf32>
    %17 = vector.shape_cast %6 : vector<1x128xf32> to vector<1x128xf32>
    %18 = vector.broadcast %17 : vector<1x128xf32> to vector<16x128xf32>
    %19 = arith.select %15, %18, %16 : vector<16x128xi1>, vector<16x128xf32>
    %c15_i32 = arith.constant 15 : i32
    %20 = vector.broadcast %c15_i32 : i32 to vector<16x128xi32>
    %21 = arith.cmpi eq, %12, %20 : vector<16x128xi32>
    %c15_i32_9 = arith.constant 15 : i32
    %22 = tpu.dynamic_rotate %1 by %c15_i32_9 dim 0 : vector<16x128xf32>, i32 -> vector<16x128xf32>
    %23 = vector.shape_cast %11 : vector<1x128xf32> to vector<1x128xf32>
    %24 = vector.broadcast %23 : vector<1x128xf32> to vector<16x128xf32>
    %25 = arith.select %21, %24, %22 : vector<16x128xi1>, vector<16x128xf32>
    %c0_10 = arith.constant 0 : index
    %c0_11 = arith.constant 0 : index
    %c0_12 = arith.constant 0 : index
    %26 = vector.load %arg5[%c0_10, %c0_11, %c0_12] : memref<3x3x128xf32, #tpu.memory_space<vmem>>, vector<3x3x128xf32>
    %c8_i32 = arith.constant 8 : i32
    %27 = vector.broadcast %c8_i32 : i32 to vector<16x128xi32>
    %28 = arith.cmpi slt, %13, %27 : vector<16x128xi32>
    %c8_i32_13 = arith.constant 8 : i32
    %29 = tpu.dynamic_rotate %19 by %c8_i32_13 dim 1 : vector<16x128xf32>, i32 -> vector<16x128xf32>
    %30 = arith.select %28, %19, %29 : vector<16x128xi1>, vector<16x128xf32>
    %c120_i32 = arith.constant 120 : i32
    %31 = vector.broadcast %c120_i32 : i32 to vector<16x128xi32>
    %32 = arith.cmpi sge, %13, %31 : vector<16x128xi32>
    %c120_i32_14 = arith.constant 120 : i32
    %33 = tpu.dynamic_rotate %19 by %c120_i32_14 dim 1 : vector<16x128xf32>, i32 -> vector<16x128xf32>
    %34 = arith.select %32, %19, %33 : vector<16x128xi1>, vector<16x128xf32>
    %35 = vector.extract_strided_slice %26 {offsets = [0, 0, 0], sizes = [1, 1, 128], strides = [1, 1, 1]} : vector<3x3x128xf32> to vector<1x1x128xf32>
    %36 = vector.shape_cast %35 : vector<1x1x128xf32> to vector<1x128xf32>
    %37 = vector.broadcast %36 : vector<1x128xf32> to vector<16x128xf32>
    %38 = arith.mulf %30, %37 : vector<16x128xf32>
    %39 = vector.extract_strided_slice %26 {offsets = [0, 1, 0], sizes = [1, 1, 128], strides = [1, 1, 1]} : vector<3x3x128xf32> to vector<1x1x128xf32>
    %40 = vector.shape_cast %39 : vector<1x1x128xf32> to vector<1x128xf32>
    %41 = vector.broadcast %40 : vector<1x128xf32> to vector<16x128xf32>
    %42 = arith.mulf %19, %41 : vector<16x128xf32>
    %43 = arith.addf %38, %42 : vector<16x128xf32>
    %44 = vector.extract_strided_slice %26 {offsets = [0, 2, 0], sizes = [1, 1, 128], strides = [1, 1, 1]} : vector<3x3x128xf32> to vector<1x1x128xf32>
    %45 = vector.shape_cast %44 : vector<1x1x128xf32> to vector<1x128xf32>
    %46 = vector.broadcast %45 : vector<1x128xf32> to vector<16x128xf32>
    %47 = arith.mulf %34, %46 : vector<16x128xf32>
    %48 = arith.addf %43, %47 : vector<16x128xf32>
    %c8_i32_15 = arith.constant 8 : i32
    %49 = vector.broadcast %c8_i32_15 : i32 to vector<16x128xi32>
    %50 = arith.cmpi slt, %13, %49 : vector<16x128xi32>
    %c8_i32_16 = arith.constant 8 : i32
    %51 = tpu.dynamic_rotate %1 by %c8_i32_16 dim 1 : vector<16x128xf32>, i32 -> vector<16x128xf32>
    %52 = arith.select %50, %1, %51 : vector<16x128xi1>, vector<16x128xf32>
    %c120_i32_17 = arith.constant 120 : i32
    %53 = vector.broadcast %c120_i32_17 : i32 to vector<16x128xi32>
    %54 = arith.cmpi sge, %13, %53 : vector<16x128xi32>
    %c120_i32_18 = arith.constant 120 : i32
    %55 = tpu.dynamic_rotate %1 by %c120_i32_18 dim 1 : vector<16x128xf32>, i32 -> vector<16x128xf32>
    %56 = arith.select %54, %1, %55 : vector<16x128xi1>, vector<16x128xf32>
    %57 = vector.extract_strided_slice %26 {offsets = [1, 0, 0], sizes = [1, 1, 128], strides = [1, 1, 1]} : vector<3x3x128xf32> to vector<1x1x128xf32>
    %58 = vector.shape_cast %57 : vector<1x1x128xf32> to vector<1x128xf32>
    %59 = vector.broadcast %58 : vector<1x128xf32> to vector<16x128xf32>
    %60 = arith.mulf %52, %59 : vector<16x128xf32>
    %61 = arith.addf %48, %60 : vector<16x128xf32>
    %62 = vector.extract_strided_slice %26 {offsets = [1, 1, 0], sizes = [1, 1, 128], strides = [1, 1, 1]} : vector<3x3x128xf32> to vector<1x1x128xf32>
    %63 = vector.shape_cast %62 : vector<1x1x128xf32> to vector<1x128xf32>
    %64 = vector.broadcast %63 : vector<1x128xf32> to vector<16x128xf32>
    %65 = arith.mulf %1, %64 : vector<16x128xf32>
    %66 = arith.addf %61, %65 : vector<16x128xf32>
    %67 = vector.extract_strided_slice %26 {offsets = [1, 2, 0], sizes = [1, 1, 128], strides = [1, 1, 1]} : vector<3x3x128xf32> to vector<1x1x128xf32>
    %68 = vector.shape_cast %67 : vector<1x1x128xf32> to vector<1x128xf32>
    %69 = vector.broadcast %68 : vector<1x128xf32> to vector<16x128xf32>
    %70 = arith.mulf %56, %69 : vector<16x128xf32>
    %71 = arith.addf %66, %70 : vector<16x128xf32>
    %c8_i32_19 = arith.constant 8 : i32
    %72 = vector.broadcast %c8_i32_19 : i32 to vector<16x128xi32>
    %73 = arith.cmpi slt, %13, %72 : vector<16x128xi32>
    %c8_i32_20 = arith.constant 8 : i32
    %74 = tpu.dynamic_rotate %25 by %c8_i32_20 dim 1 : vector<16x128xf32>, i32 -> vector<16x128xf32>
    %75 = arith.select %73, %25, %74 : vector<16x128xi1>, vector<16x128xf32>
    %c120_i32_21 = arith.constant 120 : i32
    %76 = vector.broadcast %c120_i32_21 : i32 to vector<16x128xi32>
    %77 = arith.cmpi sge, %13, %76 : vector<16x128xi32>
    %c120_i32_22 = arith.constant 120 : i32
    %78 = tpu.dynamic_rotate %25 by %c120_i32_22 dim 1 : vector<16x128xf32>, i32 -> vector<16x128xf32>
    %79 = arith.select %77, %25, %78 : vector<16x128xi1>, vector<16x128xf32>
    %80 = vector.extract_strided_slice %26 {offsets = [2, 0, 0], sizes = [1, 1, 128], strides = [1, 1, 1]} : vector<3x3x128xf32> to vector<1x1x128xf32>
    %81 = vector.shape_cast %80 : vector<1x1x128xf32> to vector<1x128xf32>
    %82 = vector.broadcast %81 : vector<1x128xf32> to vector<16x128xf32>
    %83 = arith.mulf %75, %82 : vector<16x128xf32>
    %84 = arith.addf %71, %83 : vector<16x128xf32>
    %85 = vector.extract_strided_slice %26 {offsets = [2, 1, 0], sizes = [1, 1, 128], strides = [1, 1, 1]} : vector<3x3x128xf32> to vector<1x1x128xf32>
    %86 = vector.shape_cast %85 : vector<1x1x128xf32> to vector<1x128xf32>
    %87 = vector.broadcast %86 : vector<1x128xf32> to vector<16x128xf32>
    %88 = arith.mulf %25, %87 : vector<16x128xf32>
    %89 = arith.addf %84, %88 : vector<16x128xf32>
    %90 = vector.extract_strided_slice %26 {offsets = [2, 2, 0], sizes = [1, 1, 128], strides = [1, 1, 1]} : vector<3x3x128xf32> to vector<1x1x128xf32>
    %91 = vector.shape_cast %90 : vector<1x1x128xf32> to vector<1x128xf32>
    %92 = vector.broadcast %91 : vector<1x128xf32> to vector<16x128xf32>
    %93 = arith.mulf %79, %92 : vector<16x128xf32>
    %94 = arith.addf %89, %93 : vector<16x128xf32>
    %95 = arith.truncf %94 : vector<16x128xf32> to vector<16x128xbf16>
    %c0_23 = arith.constant 0 : index
    %c0_24 = arith.constant 0 : index
    %96 = vector.load %arg6[%c0_23, %c0_24] : memref<128x128xbf16, #tpu.memory_space<vmem>>, vector<128x128xbf16>
    %cst = arith.constant dense<0.000000e+00> : vector<16x128xf32>
    %97 = tpu.matmul %95, %96, %cst {dimension_numbers = #tpu.dot_dimension_numbers<[1], [0], [0], [1], [0, 0, 1, 1], [], []>} : vector<16x128xbf16>, vector<128x128xbf16>, vector<16x128xf32> -> vector<16x128xf32>
    %c0_25 = arith.constant 0 : index
    %c0_26 = arith.constant 0 : index
    %98 = vector.load %arg7[%c0_25, %c0_26] : memref<1x128xf32, #tpu.memory_space<vmem>>, vector<1x128xf32>
    %99 = vector.broadcast %98 : vector<1x128xf32> to vector<16x128xf32>
    %100 = arith.addf %97, %99 : vector<16x128xf32>
    %101 = arith.negf %100 : vector<16x128xf32>
    %102 = math.exp %101 : vector<16x128xf32>
    %cst_27 = arith.constant 1.000000e+00 : f32
    %103 = vector.broadcast %cst_27 : f32 to vector<16x128xf32>
    %104 = arith.addf %103, %102 : vector<16x128xf32>
    %105 = arith.divf %103, %104 : vector<16x128xf32>
    %106 = arith.mulf %100, %105 : vector<16x128xf32>
    %cst_28 = arith.constant 1.000000e+00 : f32
    %107 = vector.broadcast %cst_28 : f32 to vector<16x128xf32>
    %108 = arith.mulf %106, %107 : vector<16x128xf32>
    %109 = arith.addf %108, %1 : vector<16x128xf32>
    %c0_29 = arith.constant 0 : index
    %c0_30 = arith.constant 0 : index
    %c0_31 = arith.constant 0 : index
    %110 = vector.load %arg8[%c0_29, %c0_30, %c0_31] : memref<1x16x128xf32, #tpu.memory_space<vmem>>, vector<1x16x128xf32>
    %111 = vector.shape_cast %110 : vector<1x16x128xf32> to vector<16x128xf32>
    %112 = vector.shape_cast %109 : vector<16x128xf32> to vector<1x16x128xf32>
    tpu.vector_store %arg8[%c0_29, %c0_30, %c0_31], %112 {strides = array<i32>} : memref<1x16x128xf32, #tpu.memory_space<vmem>>, vector<1x16x128xf32>,
    return
  }
  func.func @transform_0(%arg0: i32, %arg1: i32) -> (i32, i32, i32) {
    %c0_i32 = arith.constant 0 : i32
    %c0_i32_0 = arith.constant 0 : i32
    return %arg0, %arg1, %c0_i32 : i32, i32, i32
  }
  func.func @transform_1(%arg0: i32, %arg1: i32) -> (i32, i32, i32) {
    %c2_i32 = arith.constant 2 : i32
    %0 = arith.muli %arg1, %c2_i32 : i32
    %c1_i32 = arith.constant 1 : i32
    %1 = arith.subi %0, %c1_i32 : i32
    %c0_i32 = arith.constant 0 : i32
    %2 = arith.maxsi %1, %c0_i32 : i32
    %c0_i32_0 = arith.constant 0 : i32
    %c0_i32_1 = arith.constant 0 : i32
    return %arg0, %2, %c0_i32_0 : i32, i32, i32
  }
  func.func @transform_2(%arg0: i32, %arg1: i32) -> (i32, i32, i32) {
    %c1_i32 = arith.constant 1 : i32
    %0 = arith.addi %arg1, %c1_i32 : i32
    %c2_i32 = arith.constant 2 : i32
    %1 = arith.muli %0, %c2_i32 : i32
    %c1_i32_0 = arith.constant 1 : i32
    %2 = arith.minsi %1, %c1_i32_0 : i32
    %c0_i32 = arith.constant 0 : i32
    %c0_i32_1 = arith.constant 0 : i32
    return %arg0, %2, %c0_i32 : i32, i32, i32
  }
  func.func @transform_3(%arg0: i32, %arg1: i32) -> (i32, i32, i32) {
    %c0_i32 = arith.constant 0 : i32
    %c0_i32_0 = arith.constant 0 : i32
    %c0_i32_1 = arith.constant 0 : i32
    %c0_i32_2 = arith.constant 0 : i32
    return %c0_i32, %c0_i32_0, %c0_i32_1 : i32, i32, i32
  }
  func.func @transform_4(%arg0: i32, %arg1: i32) -> (i32, i32) {
    %c0_i32 = arith.constant 0 : i32
    %c0_i32_0 = arith.constant 0 : i32
    %c0_i32_1 = arith.constant 0 : i32
    return %c0_i32, %c0_i32_0 : i32, i32
  }
  func.func @transform_5(%arg0: i32, %arg1: i32) -> (i32, i32) {
    %c0_i32 = arith.constant 0 : i32
    %c0_i32_0 = arith.constant 0 : i32
    %c0_i32_1 = arith.constant 0 : i32
    return %c0_i32, %c0_i32_0 : i32, i32
  }
  func.func @transform_6(%arg0: i32, %arg1: i32) -> (i32, i32, i32) {
    %c0_i32 = arith.constant 0 : i32
    %c0_i32_0 = arith.constant 0 : i32
    return %arg0, %arg1, %c0_i32 : i32, i32, i32
  }
}

</mosaic_0001>

<llo_original>
// kernel: tpu_custom_call.1
$region0: #{tpu_custom_call.1}
  #allocation0 [shape = 'u32[]', space=smem, size = 0x4, offset = 0x4, fixed_abs, tag = 'smem constant byte address 0x4 - core index']
  #allocation1 [shape = 'u32[72,128]{1,0:T(1,128)}', space=vmem, size = 0x9000, scoped, tag = 'internal scratch']
  %s0 = inlined_call_operand.hbm [shape: f32[2,16,128], index: 0, kind: input, shape index: {}]
  %s1 = inlined_call_operand.hbm [shape: f32[2,16,128], index: 1, kind: input, shape index: {}]
  %s2 = inlined_call_operand.hbm [shape: f32[2,16,128], index: 2, kind: input, shape index: {}]
  %s3 = inlined_call_operand.hbm [shape: f32[3,3,128], index: 3, kind: input, shape index: {}]
  %s4 = inlined_call_operand.hbm [shape: bf16[128,128], index: 4, kind: input, shape index: {}]
  %s5 = inlined_call_operand.vmem [shape: f32[1,128], index: 5, kind: input, shape index: {}]
  %s6 = inlined_call_operand.hbm [shape: f32[2,16,128], index: 6, kind: output, shape index: {}]
  %s7 = sld [smem:[#allocation0]]
  $region77: #{tpu_custom_call.1} parent=0
    _
  %s9 = ssub.s32 1, %s7
  %s10 = scalar_select 0, %s9, %s7
  $region1: #{tpu_custom_call.1} parent=0
    #allocation2 [shape = 'u8[16384]{0}', space=vmem, size = 0x4000, scoped, tag = 'input window, operand 0']
    #allocation3 [shape = 's32[2]{0}', space=sflag, size = 0x8, scoped, tag = 'scoped memory for tpu_custom_call.1']
    #allocation4 [shape = 's32[2]{0}', space=sflag, size = 0x8, scoped, tag = 'scoped memory for tpu_custom_call.1']
    #allocation5 [shape = 'u8[8192]{0}', space=vmem, size = 0x2000, scoped, tag = 'input window, operand 1']
    #allocation6 [shape = 's32[2]{0}', space=sflag, size = 0x8, scoped, tag = 'scoped memory for tpu_custom_call.1']
    #allocation7 [shape = 'u8[8192]{0}', space=vmem, size = 0x2000, scoped, tag = 'input window, operand 2']
    #allocation8 [shape = 'u8[6144]{0}', space=vmem, size = 0x1800, scoped, tag = 'input window, operand 3, single buffered']
    #allocation9 [shape = 's32[1]{0}', space=sflag, size = 0x4, scoped, tag = 'scoped memory for tpu_custom_call.1']
    #allocation10 [shape = 'u8[32768]{0}', space=vmem, size = 0x8000, scoped, tag = 'input window, operand 4, single buffered']
    #allocation11 [shape = 'u8[16384]{0}', space=vmem, size = 0x4000, scoped, tag = 'output window, operand 0']
    %11 = vsyncpa [#allocation3], 0
    %s12 = scalar_lea.sflag [#allocation3], 1
    %13 = vsyncpa %s12, 0
    %14 = vsyncpa [#allocation6], 0
    %s15 = scalar_lea.sflag [#allocation6], 1
    %16 = vsyncpa %s15, 0
    %17 = vsyncpa [#allocation9], 0
    %18 = vsyncpa [#allocation4], 0
    %s19 = scalar_lea.sflag [#allocation4], 1
    %20 = vsyncpa %s19, 0
    loop: start=0, step=1, limit=4
    $region2: #{tpu_custom_call.1} parent=1 // loop_pre_header
      _
    $region3: #{tpu_custom_call.1} parent=1 // loop_header
      %s22 = sphi 0, %s26
      %p23 = scmp.ge.s32.totalorder %s22, 4
      %s29 = sphi 0, %s41
      %s30 = sphi 0, %s37
      %s31 = sphi 0, %s29
      %s32 = sphi 0, %s30
      %s33 = sphi 0, %s31
      %s34 = sphi 0, %s32
      %s46 = sphi 0, %s48
      %s49 = sphi 0, %s46
      %s50 = sphi 0, %s49
      %s66 = sphi 0, %s50
      %s82 = sphi 0, %s84
      %s85 = sphi 0, %s82
      %s86 = sphi 0, %s85
      %s102 = sphi 0, %s86
      %s118 = sphi 0, %s120
      %s121 = sphi 0, %s118
      %s122 = sphi 0, %s121
      %s138 = sphi 0, %s122
      %s142 = sphi 0, %s142
      %s144 = sphi 0, %s142
      %s145 = sphi 0, %s144
      %s159 = sphi 0, %s145
      %s163 = sphi 0, %s163
      %s165 = sphi 0, %s163
      %s166 = sphi 0, %s165
      %s180 = sphi 0, %s166
      %s184 = sphi 0, %s184
      %s186 = sphi 0, %s184
      %s187 = sphi 0, %s186
      %s201 = sphi 0, %s187
      %s209 = sphi 0, %s211
      %s212 = sphi 0, %s209
      %s213 = sphi 0, %s212
      %s229 = sphi 0, %s213
    $region4: #{tpu_custom_call.1} parent=1 // loop_header_branch
      %25 = sbr.rel (%p23) target = $region8
    $region5: #{tpu_custom_call.1} parent=1 // loop_body
      %s27 = ssub.s32 %s22, 1
      %s28 = ssub.s32 %s22, 2
      %s35 = sadd.s32 1, %s30
      %p36 = scmp.ge.s32.totalorder %s35, 1
      %s37 = scalar_select %p36, 0, %s35
      %s38 = sadd.s32 1, %s29
      %s39 = scalar_select %p36, %s38, %s29
      %p40 = scmp.ge.s32.totalorder %s39, 2
      %s41 = scalar_select %p40, 0, %s39
      %s42 = ssub.s32 %s29, %s41
      %s43 = ssub.s32 %s30, %s37
      %s44 = sor.u32 %s42, %s43
      %p45 = scmp.eq.s32.totalorder %s44, 0
      %s47 = sadd.s32 %s46, 1
      %s48 = scalar_select %p45, %s46, %s47
      %p51 = pneg %p45
      %p52 = scmp.eq.s32.totalorder %s22, 1
      %p53 = por %p51, %p52
      %p54 = scmp.ne.s32.totalorder %s46, %s49
      %p55 = scmp.eq.s32.totalorder %s22, 0
      %p56 = por %p54, %p55
      %p57 = scmp.ne.s32.totalorder %s46, %s49
      %p58 = scmp.eq.s32.totalorder %s27, 1
      %p59 = por %p57, %p58
      %p60 = scmp.ne.s32.totalorder %s49, %s50
      %p61 = scmp.eq.s32.totalorder %s27, 0
      %p62 = por %p60, %p61
      %p63 = scmp.ne.s32.totalorder %s49, %s50
      %p64 = scmp.eq.s32.totalorder %s28, 1
      %p65 = por %p63, %p64
      %p67 = scmp.ne.s32.totalorder %s50, %s66
      %p68 = scmp.eq.s32.totalorder %s28, 0
      %p69 = por %p67, %p68
      %s70 = smul.u32 %s30, 2
      %s71 = ssub.s32 %s70, 1
      %p72 = scmp.gt.s32.totalorder %s71, 0
      %s73 = scalar_select %p72, %s71, 0
      %s74 = smul.u32 %s37, 2
      %s75 = ssub.s32 %s74, 1
      %p76 = scmp.gt.s32.totalorder %s75, 0
      %s77 = scalar_select %p76, %s75, 0
      %s78 = ssub.s32 %s29, %s41
      %s79 = ssub.s32 %s73, %s77
      %s80 = sor.u32 %s78, %s79
      %p81 = scmp.eq.s32.totalorder %s80, 0
      %s83 = sadd.s32 %s82, 1
      %s84 = scalar_select %p81, %s82, %s83
      %p87 = pneg %p81
      %p88 = scmp.eq.s32.totalorder %s22, 1
      %p89 = por %p87, %p88
      %p90 = scmp.ne.s32.totalorder %s82, %s85
      %p91 = scmp.eq.s32.totalorder %s22, 0
      %p92 = por %p90, %p91
      %p93 = scmp.ne.s32.totalorder %s82, %s85
      %p94 = scmp.eq.s32.totalorder %s27, 1
      %p95 = por %p93, %p94
      %p96 = scmp.ne.s32.totalorder %s85, %s86
      %p97 = scmp.eq.s32.totalorder %s27, 0
      %p98 = por %p96, %p97
      %p99 = scmp.ne.s32.totalorder %s85, %s86
      %p100 = scmp.eq.s32.totalorder %s28, 1
      %p101 = por %p99, %p100
      %p103 = scmp.ne.s32.totalorder %s86, %s102
      %p104 = scmp.eq.s32.totalorder %s28, 0
      %p105 = por %p103, %p104
      %s106 = sadd.s32 %s30, 1
      %s107 = smul.u32 %s106, 2
      %p108 = scmp.lt.s32.totalorder %s107, 1
      %s109 = scalar_select %p108, %s107, 1
      %s110 = sadd.s32 %s37, 1
      %s111 = smul.u32 %s110, 2
      %p112 = scmp.lt.s32.totalorder %s111, 1
      %s113 = scalar_select %p112, %s111, 1
      %s114 = ssub.s32 %s29, %s41
      %s115 = ssub.s32 %s109, %s113
      %s116 = sor.u32 %s114, %s115
      %p117 = scmp.eq.s32.totalorder %s116, 0
      %s119 = sadd.s32 %s118, 1
      %s120 = scalar_select %p117, %s118, %s119
      %p123 = pneg %p117
      %p124 = scmp.eq.s32.totalorder %s22, 1
      %p125 = por %p123, %p124
      %p126 = scmp.ne.s32.totalorder %s118, %s121
      %p127 = scmp.eq.s32.totalorder %s22, 0
      %p128 = por %p126, %p127
      %p129 = scmp.ne.s32.totalorder %s118, %s121
      %p130 = scmp.eq.s32.totalorder %s27, 1
      %p131 = por %p129, %p130
      %p132 = scmp.ne.s32.totalorder %s121, %s122
      %p133 = scmp.eq.s32.totalorder %s27, 0
      %p134 = por %p132, %p133
      %p135 = scmp.ne.s32.totalorder %s121, %s122
      %p136 = scmp.eq.s32.totalorder %s28, 1
      %p137 = por %p135, %p136
      %p139 = scmp.ne.s32.totalorder %s122, %s138
      %p140 = scmp.eq.s32.totalorder %s28, 0
      %p141 = por %p139, %p140
      %s143 = sadd.s32 %s142, 1
      %p146 = scmp.eq.s32.totalorder %s22, 1
      %p147 = scmp.ne.s32.totalorder %s142, %s144
      %p148 = scmp.eq.s32.totalorder %s22, 0
      %p149 = por %p147, %p148
      %p150 = scmp.ne.s32.totalorder %s142, %s144
      %p151 = scmp.eq.s32.totalorder %s27, 1
      %p152 = por %p150, %p151
      %p153 = scmp.ne.s32.totalorder %s144, %s145
      %p154 = scmp.eq.s32.totalorder %s27, 0
      %p155 = por %p153, %p154
      %p156 = scmp.ne.s32.totalorder %s144, %s145
      %p157 = scmp.eq.s32.totalorder %s28, 1
      %p158 = por %p156, %p157
      %p160 = scmp.ne.s32.totalorder %s145, %s159
      %p161 = scmp.eq.s32.totalorder %s28, 0
      %p162 = por %p160, %p161
      %s164 = sadd.s32 %s163, 1
      %p167 = scmp.eq.s32.totalorder %s22, 1
      %p168 = scmp.ne.s32.totalorder %s163, %s165
      %p169 = scmp.eq.s32.totalorder %s22, 0
      %p170 = por %p168, %p169
      %p171 = scmp.ne.s32.totalorder %s163, %s165
      %p172 = scmp.eq.s32.totalorder %s27, 1
      %p173 = por %p171, %p172
      %p174 = scmp.ne.s32.totalorder %s165, %s166
      %p175 = scmp.eq.s32.totalorder %s27, 0
      %p176 = por %p174, %p175
      %p177 = scmp.ne.s32.totalorder %s165, %s166
      %p178 = scmp.eq.s32.totalorder %s28, 1
      %p179 = por %p177, %p178
      %p181 = scmp.ne.s32.totalorder %s166, %s180
      %p182 = scmp.eq.s32.totalorder %s28, 0
      %p183 = por %p181, %p182
      %s185 = sadd.s32 %s184, 1
      %p188 = scmp.eq.s32.totalorder %s22, 1
      %p189 = scmp.ne.s32.totalorder %s184, %s186
      %p190 = scmp.eq.s32.totalorder %s22, 0
      %p191 = por %p189, %p190
      %p192 = scmp.ne.s32.totalorder %s184, %s186
      %p193 = scmp.eq.s32.totalorder %s27, 1
      %p194 = por %p192, %p193
      %p195 = scmp.ne.s32.totalorder %s186, %s187
      %p196 = scmp.eq.s32.totalorder %s27, 0
      %p197 = por %p195, %p196
      %p198 = scmp.ne.s32.totalorder %s186, %s187
      %p199 = scmp.eq.s32.totalorder %s28, 1
      %p200 = por %p198, %p199
      %p202 = scmp.ne.s32.totalorder %s187, %s201
      %p203 = scmp.eq.s32.totalorder %s28, 0
      %p204 = por %p202, %p203
      %s205 = ssub.s32 %s29, %s41
      %s206 = ssub.s32 %s30, %s37
      %s207 = sor.u32 %s205, %s206
      %p208 = scmp.eq.s32.totalorder %s207, 0
      %s210 = sadd.s32 %s209, 1
      %s211 = scalar_select %p208, %s209, %s210
      %p214 = pneg %p208
      %p215 = scmp.eq.s32.totalorder %s22, 1
      %p216 = por %p214, %p215
      %p217 = scmp.ne.s32.totalorder %s209, %s212
      %p218 = scmp.eq.s32.totalorder %s22, 0
      %p219 = por %p217, %p218
      %p220 = scmp.ne.s32.totalorder %s209, %s212
      %p221 = scmp.eq.s32.totalorder %s27, 1
      %p222 = por %p220, %p221
      %p223 = scmp.ne.s32.totalorder %s212, %s213
      %p224 = scmp.eq.s32.totalorder %s27, 0
      %p225 = por %p223, %p224
      %p226 = scmp.ne.s32.totalorder %s212, %s213
      %p227 = scmp.eq.s32.totalorder %s28, 1
      %p228 = por %p226, %p227
      %p230 = scmp.ne.s32.totalorder %s213, %s229
      %p231 = scmp.eq.s32.totalorder %s28, 0
      %p232 = por %p230, %p231
      %p233 = scmp.le.s32.totalorder 1, %s22
      %p234 = scmp.lt.s32.totalorder %s22, 3
      %p235 = pnand %p233, %p234
      %p236 = pneg %p235
      // Predicated region
      $region9: #{tpu_custom_call.1} parent=5 // pred_check
        _
      $region10: #{tpu_custom_call.1} parent=5 // pred_check_branch
        %238 = sbr.rel (%p235) target = $region12
      $region11: #{tpu_custom_call.1} parent=5 // pred_region
        %s239 = ssub.s32 %s22, 1
        // Predicated region
        $region13: #{tpu_custom_call.1} parent=11 // pred_check
          %p240 = pneg %p155
        $region14: #{tpu_custom_call.1} parent=11 // pred_check_branch
          %242 = sbr.rel (%p240) target = $region16
        $region15: #{tpu_custom_call.1} parent=11 // pred_region
          %244 = vsyncadd [#allocation9], 0
          %s245 = sshll.u32 %s3, 4
          %s246 = int_to_ptr.hbm [resolvable:$true] %s245
          %s247 = sshll.u32 [#allocation8], 4
          %s248 = int_to_ptr.vmem [resolvable:$true] %s247
          %253 = dma.hbm_to_vmem [thread:$0]  %s246, 192, %s248, [#allocation9], 64, 64, 4
        $region16: #{tpu_custom_call.1} parent=11 // pred_fallthru
          _
        // Predicated region
        $region17: #{tpu_custom_call.1} parent=11 // pred_check
          %p254 = pneg %p176
        $region18: #{tpu_custom_call.1} parent=11 // pred_check_branch
          %256 = sbr.rel (%p254) target = $region20
        $region19: #{tpu_custom_call.1} parent=11 // pred_region
          %258 = vsyncadd [#allocation9], 0
          %s259 = sshll.u32 %s4, 4
          %s260 = int_to_ptr.hbm [resolvable:$true] %s259
          %s261 = sshll.u32 [#allocation10], 4
          %s262 = int_to_ptr.vmem [resolvable:$true] %s261
          %267 = dma.hbm_to_vmem [thread:$0]  %s260, 1024, %s262, [#allocation9], 64, 64, 4
        $region20: #{tpu_custom_call.1} parent=11 // pred_fallthru
          _
        // Predicated region
        $region21: #{tpu_custom_call.1} parent=11 // pred_check
          %p268 = pneg %p197
        $region22: #{tpu_custom_call.1} parent=11 // pred_check_branch
          %270 = sbr.rel (%p268) target = $region24
        $region23: #{tpu_custom_call.1} parent=11 // pred_region
          _
        $region24: #{tpu_custom_call.1} parent=11 // pred_fallthru
          _
      $region12: #{tpu_custom_call.1} parent=5 // pred_fallthru
        _
      %p271 = scmp.lt.s32.totalorder %s22, 2
      // Predicated region
      $region25: #{tpu_custom_call.1} parent=5 // pred_check
        %p272 = pneg %p271
      $region26: #{tpu_custom_call.1} parent=5 // pred_check_branch
        %274 = sbr.rel (%p272) target = $region28
      $region27: #{tpu_custom_call.1} parent=5 // pred_region
        // Predicated region
        $region29: #{tpu_custom_call.1} parent=27 // pred_check
          %p275 = pneg %p56
        $region30: #{tpu_custom_call.1} parent=27 // pred_check_branch
          %277 = sbr.rel (%p275) target = $region32
        $region31: #{tpu_custom_call.1} parent=27 // pred_region
          %s278 = sand.u32 %s46, 1
          %s279 = scalar_lea.sflag [#allocation3], %s278
          %s280 = sand.u32 %s46, 1
          %s281 = smul.addr %s280, 16
          %s282 = scalar_lea.vmem [#allocation2], %s281
          %s283 = smul.u32 2, %s30
          %285 = vsyncadd %s279, 0
          %s286 = smul.addr %s29, 2
          %s287 = sadd.s32 %s283, %s286
          %s288 = smul.addr %s287, 8
          %s289 = scalar_lea.hbm %s0, %s288
          %s290 = sshll.u32 %s289, 4
          %s291 = int_to_ptr.hbm [resolvable:$true] %s290
          %s292 = sshll.u32 %s282, 4
          %s293 = int_to_ptr.vmem [resolvable:$true] %s292
          %298 = dma.hbm_to_vmem [thread:$0]  %s291, 256, %s293, %s279, 128, 128, 8
        $region32: #{tpu_custom_call.1} parent=27 // pred_fallthru
          _
        // Predicated region
        $region33: #{tpu_custom_call.1} parent=27 // pred_check
          %p299 = pneg %p92
        $region34: #{tpu_custom_call.1} parent=27 // pred_check_branch
          %301 = sbr.rel (%p299) target = $region36
        $region35: #{tpu_custom_call.1} parent=27 // pred_region
          %s302 = sand.u32 %s22, 1
          %s303 = scalar_lea.sflag [#allocation6], %s302
          %s304 = sand.u32 %s82, 1
          %s305 = smul.addr %s304, 8
          %s306 = scalar_lea.vmem [#allocation5], %s305
          %s307 = smul.u32 %s30, 2
          %s308 = ssub.s32 %s307, 1
          %p309 = scmp.gt.s32.totalorder %s308, 0
          %s310 = scalar_select %p309, %s308, 0
          %312 = vsyncadd %s303, 0
          %s313 = smul.addr %s29, 2
          %s314 = sadd.s32 %s310, %s313
          %s315 = smul.addr %s314, 8
          %s316 = scalar_lea.hbm %s1, %s315
          %s318 = sshll.u32 %s316, 4
          %s319 = int_to_ptr.hbm [resolvable:$true] %s318
          %s320 = sshll.u32 %s306, 4
          %s321 = int_to_ptr.vmem [resolvable:$true] %s320
          %323 = dma.hbm_to_vmem [thread:$0]  %s319, 128, %s321, %s303
        $region36: #{tpu_custom_call.1} parent=27 // pred_fallthru
          _
        // Predicated region
        $region37: #{tpu_custom_call.1} parent=27 // pred_check
          %p324 = pneg %p128
        $region38: #{tpu_custom_call.1} parent=27 // pred_check_branch
          %326 = sbr.rel (%p324) target = $region40
        $region39: #{tpu_custom_call.1} parent=27 // pred_region
          %s327 = sand.u32 %s22, 1
          %s328 = scalar_lea.sflag [#allocation6], %s327
          %s329 = sand.u32 %s118, 1
          %s330 = smul.addr %s329, 8
          %s331 = scalar_lea.vmem [#allocation7], %s330
          %s332 = sadd.s32 %s30, 1
          %s333 = smul.u32 %s332, 2
          %p334 = scmp.lt.s32.totalorder %s333, 1
          %s335 = scalar_select %p334, %s333, 1
          %337 = vsyncadd %s328, 0
          %s338 = smul.addr %s29, 2
          %s339 = sadd.s32 %s335, %s338
          %s340 = smul.addr %s339, 8
          %s341 = scalar_lea.hbm %s2, %s340
          %s343 = sshll.u32 %s341, 4
          %s344 = int_to_ptr.hbm [resolvable:$true] %s343
          %s345 = sshll.u32 %s331, 4
          %s346 = int_to_ptr.vmem [resolvable:$true] %s345
          %348 = dma.hbm_to_vmem [thread:$0]  %s344, 128, %s346, %s328
        $region40: #{tpu_custom_call.1} parent=27 // pred_fallthru
          _
      $region28: #{tpu_custom_call.1} parent=5 // pred_fallthru
        _
      %p349 = scmp.le.s32.totalorder 1, %s22
      %p350 = scmp.lt.s32.totalorder %s22, 3
      %p351 = pnand %p349, %p350
      %p352 = pneg %p351
      // Predicated region
      $region41: #{tpu_custom_call.1} parent=5 // pred_check
        _
      $region42: #{tpu_custom_call.1} parent=5 // pred_check_branch
        %354 = sbr.rel (%p351) target = $region44
      $region43: #{tpu_custom_call.1} parent=5 // pred_region
        %s355 = ssub.s32 %s22, 1
        %s356 = sand.u32 %s49, 1
        %s357 = scalar_lea.sflag [#allocation3], %s356
        %s358 = sand.u32 %s49, 1
        %s359 = smul.addr %s358, 16
        %s360 = scalar_lea.vmem [#allocation2], %s359
        // Predicated region
        $region45: #{tpu_custom_call.1} parent=43 // pred_check
          %p361 = pneg %p62
        $region46: #{tpu_custom_call.1} parent=43 // pred_check_branch
          %363 = sbr.rel (%p361) target = $region48
        $region47: #{tpu_custom_call.1} parent=43 // pred_region
          %365 = dma.done %s357, 256
        $region48: #{tpu_custom_call.1} parent=43 // pred_fallthru
          _
        %s366 = sand.u32 %s27, 1
        %s367 = scalar_lea.sflag [#allocation6], %s366
        %s368 = sand.u32 %s85, 1
        %s369 = smul.addr %s368, 8
        %s370 = scalar_lea.vmem [#allocation5], %s369
        // Predicated region
        $region49: #{tpu_custom_call.1} parent=43 // pred_check
          %p371 = pneg %p98
        $region50: #{tpu_custom_call.1} parent=43 // pred_check_branch
          %373 = sbr.rel (%p371) target = $region52
        $region51: #{tpu_custom_call.1} parent=43 // pred_region
          %375 = dma.done %s367, 128
        $region52: #{tpu_custom_call.1} parent=43 // pred_fallthru
          _
        %s376 = sand.u32 %s27, 1
        %s377 = scalar_lea.sflag [#allocation6], %s376
        %s378 = sand.u32 %s121, 1
        %s379 = smul.addr %s378, 8
        %s380 = scalar_lea.vmem [#allocation7], %s379
        // Predicated region
        $region53: #{tpu_custom_call.1} parent=43 // pred_check
          %p381 = pneg %p134
        $region54: #{tpu_custom_call.1} parent=43 // pred_check_branch
          %383 = sbr.rel (%p381) target = $region56
        $region55: #{tpu_custom_call.1} parent=43 // pred_region
          %385 = dma.done %s377, 128
        $region56: #{tpu_custom_call.1} parent=43 // pred_fallthru
          _
        // Predicated region
        $region57: #{tpu_custom_call.1} parent=43 // pred_check
          %p386 = pneg %p155
        $region58: #{tpu_custom_call.1} parent=43 // pred_check_branch
          %388 = sbr.rel (%p386) target = $region60
        $region59: #{tpu_custom_call.1} parent=43 // pred_region
          %390 = dma.done [#allocation9], 192
        $region60: #{tpu_custom_call.1} parent=43 // pred_fallthru
          _
        // Predicated region
        $region61: #{tpu_custom_call.1} parent=43 // pred_check
          %p391 = pneg %p176
        $region62: #{tpu_custom_call.1} parent=43 // pred_check_branch
          %393 = sbr.rel (%p391) target = $region64
        $region63: #{tpu_custom_call.1} parent=43 // pred_region
          %395 = dma.done [#allocation9], 1024
        $region64: #{tpu_custom_call.1} parent=43 // pred_fallthru
          _
        %s396 = sand.u32 %s49, 1
        %s397 = scalar_lea.sflag [#allocation3], %s396
        %s398 = sand.u32 %s49, 1
        %s399 = smul.addr %s398, 16
        %s400 = scalar_lea.vmem [#allocation2], %s399
        %p401 = pneg %p62
        %p402 = pneg %p59
        %s403 = sand.u32 %s27, 1
        %s404 = scalar_lea.sflag [#allocation6], %s403
        %s405 = sand.u32 %s85, 1
        %s406 = smul.addr %s405, 8
        %s407 = scalar_lea.vmem [#allocation5], %s406
        %p408 = pneg %p98
        %p409 = pneg %p95
        %s410 = sand.u32 %s27, 1
        %s411 = scalar_lea.sflag [#allocation6], %s410
        %s412 = sand.u32 %s121, 1
        %s413 = smul.addr %s412, 8
        %s414 = scalar_lea.vmem [#allocation7], %s413
        %p415 = pneg %p134
        %p416 = pneg %p131
        %p417 = pneg %p155
        %p418 = pneg %p152
        %p419 = pneg %p176
        %p420 = pneg %p173
        %p421 = pneg %p197
        %p422 = pneg %p194
        %p423 = pneg %p225
        %p424 = pneg %p222
        %s425 = sand.u32 %s212, 1
        %s426 = scalar_lea.sflag [#allocation4], %s425
        %s427 = sand.u32 %s212, 1
        %s428 = smul.addr %s427, 16
        %s429 = scalar_lea.vmem [#allocation11], %s428
        %s430 = smul.u32 2, %s32
        %s431 = smul.u32 %s32, 2
        %s432 = ssub.s32 %s431, 1
        %p433 = scmp.gt.s32.totalorder %s432, 0
        %s434 = scalar_select %p433, %s432, 0
        %s435 = sadd.s32 %s32, 1
        %s436 = smul.u32 %s435, 2
        %p437 = scmp.lt.s32.totalorder %s436, 1
        %s438 = scalar_select %p437, %s436, 1
        %s439 = smul.u32 2, %s32
        %v440 = vld [vmem:[%s360] sm:$0xff]
        %v441 = vld [vmem:[%s360 + $0x8] sm:$0xff]
        %p442 = scmp.eq.s32.totalorder %s32, 0
        %v443 = vld [vmem:[%s370 + $0x7] sm:$0x1]
        %s444 = scalar_select %p442, 1, 0
        %v445 = vstv %s444
        %vm446 = vcmp.eq.s32.totalorder %v445, 1
        %v447 = vsel %vm446, %v440, %v443
        %v448 = vld [vmem:[%s380] sm:$0x1]
        %v450 = vrot.slane %v448, 1
        %v452 = vsel %vm446, %v441, %v450
        %v453 = vlaneseq
        %v454 = vshrl.u32 %v453, 7
        %v455 = vadd.s32 %v454, 8
        %v456 = vlaneseq
        %v457 = vand.u32 %v456, 127
        %vm458 = vcmp.eq.s32.totalorder %v454, 0
        %vm459 = vcmp.eq.s32.totalorder %v455, 0
        %v460 = vrot.slane %v440, 7
        %v461 = vrot.slane %v441, 7
        %vm462 = vcmp.lt.s32.totalorder %v454, 1
        %v463 = vsel %vm462, %v460, %v461
        %v464 = vsel %vm462, %v461, %v460
        %v465 = vperm.slane %v447, 0
        %v466 = vsel %vm458, %v465, %v464
        %v467 = vsel %vm459, %v465, %v463
        %vm468 = vcmp.eq.s32.totalorder %v454, 15
        %vm469 = vcmp.eq.s32.totalorder %v455, 15
        %v470 = vrot.slane %v440, 1
        %v471 = vrot.slane %v441, 1
        %vm472 = vcmp.lt.s32.totalorder %v454, 7
        %v473 = vsel %vm472, %v470, %v471
        %v474 = vsel %vm472, %v471, %v470
        %v475 = vperm.slane %v452, 7
        %v476 = vsel %vm468, %v475, %v473
        %v477 = vsel %vm469, %v475, %v474
        %v478 = vld [vmem:[#allocation8] sm:$0x7]
        %v479 = vld [vmem:[#allocation8 + $0x4] sm:$0x7]
        %v480 = vld [vmem:[#allocation8 + $0x8] sm:$0x7]
        %vm481 = vcmp.lt.s32.totalorder %v457, 8
        %482 = vrot.lane.b32.xlu0 %v466, 8
        %v483 = vpop.permute.xlu0 %482
        %484 = vrot.lane.b32.xlu0 %v467, 8
        %v485 = vpop.permute.xlu0 %484
        %v486 = vsel %vm481, %v466, %v483
        %v487 = vsel %vm481, %v467, %v485
        %vm488 = vcmp.ge.s32.totalorder %v457, 120
        %489 = vrot.lane.b32.xlu0 %v466, 120
        %v490 = vpop.permute.xlu0 %489
        %491 = vrot.lane.b32.xlu0 %v467, 120
        %v492 = vpop.permute.xlu0 %491
        %v493 = vsel %vm488, %v466, %v490
        %v494 = vsel %vm488, %v467, %v492
        %v495 = vperm.slane %v478, 0
        %v496 = vmul.f32 %v486, %v495
        %v497 = vmul.f32 %v487, %v495
        %v498 = vperm.slane %v478, 1
        %v499 = vmul.f32 %v466, %v498
        %v500 = vmul.f32 %v467, %v498
        %v501 = vadd.f32 %v496, %v499
        %v502 = vadd.f32 %v497, %v500
        %v503 = vperm.slane %v478, 2
        %v504 = vmul.f32 %v493, %v503
        %v505 = vmul.f32 %v494, %v503
        %v506 = vadd.f32 %v501, %v504
        %v507 = vadd.f32 %v502, %v505
        %508 = vrot.lane.b32.xlu0 %v440, 8
        %v509 = vpop.permute.xlu0 %508
        %510 = vrot.lane.b32.xlu0 %v441, 8
        %v511 = vpop.permute.xlu0 %510
        %v512 = vsel %vm481, %v440, %v509
        %v513 = vsel %vm481, %v441, %v511
        %514 = vrot.lane.b32.xlu0 %v440, 120
        %v515 = vpop.permute.xlu0 %514
        %516 = vrot.lane.b32.xlu0 %v441, 120
        %v517 = vpop.permute.xlu0 %516
        %v518 = vsel %vm488, %v440, %v515
        %v519 = vsel %vm488, %v441, %v517
        %v520 = vperm.slane %v479, 0
        %v521 = vmul.f32 %v512, %v520
        %v522 = vmul.f32 %v513, %v520
        %v523 = vadd.f32 %v506, %v521
        %v524 = vadd.f32 %v507, %v522
        %v525 = vperm.slane %v479, 1
        %v526 = vmul.f32 %v440, %v525
        %v527 = vmul.f32 %v441, %v525
        %v528 = vadd.f32 %v523, %v526
        %v529 = vadd.f32 %v524, %v527
        %v530 = vperm.slane %v479, 2
        %v531 = vmul.f32 %v518, %v530
        %v532 = vmul.f32 %v519, %v530
        %v533 = vadd.f32 %v528, %v531
        %v534 = vadd.f32 %v529, %v532
        %535 = vrot.lane.b32.xlu0 %v476, 8
        %v536 = vpop.permute.xlu0 %535
        %537 = vrot.lane.b32.xlu0 %v477, 8
        %v538 = vpop.permute.xlu0 %537
        %v539 = vsel %vm481, %v476, %v536
        %v540 = vsel %vm481, %v477, %v538
        %541 = vrot.lane.b32.xlu0 %v476, 120
        %v542 = vpop.permute.xlu0 %541
        %543 = vrot.lane.b32.xlu0 %v477, 120
        %v544 = vpop.permute.xlu0 %543
        %v545 = vsel %vm488, %v476, %v542
        %v546 = vsel %vm488, %v477, %v544
        %v547 = vperm.slane %v480, 0
        %v548 = vmul.f32 %v539, %v547
        %v549 = vmul.f32 %v540, %v547
        %v550 = vadd.f32 %v533, %v548
        %v551 = vadd.f32 %v534, %v549
        %v552 = vperm.slane %v480, 1
        %v553 = vmul.f32 %v476, %v552
        %v554 = vmul.f32 %v477, %v552
        %v555 = vadd.f32 %v550, %v553
        %v556 = vadd.f32 %v551, %v554
        %v557 = vperm.slane %v480, 2
        %v558 = vmul.f32 %v545, %v557
        %v559 = vmul.f32 %v546, %v557
        %v560 = vadd.f32 %v555, %v558
        %v561 = vadd.f32 %v556, %v559
        %v562 = vpack.c.bf16 %v561, %v560
        %v563 = vld [vmem:[#allocation10] sm:$0xf]
        %v564 = vld [vmem:[#allocation10 + $0x4] sm:$0xf]
        %v565 = vld [vmem:[#allocation10 + $0x8] sm:$0xf]
        %v566 = vld [vmem:[#allocation10 + $0xc] sm:$0xf]
        %v567 = vld [vmem:[#allocation10 + $0x10] sm:$0xf]
        %v568 = vld [vmem:[#allocation10 + $0x14] sm:$0xf]
        %v569 = vld [vmem:[#allocation10 + $0x18] sm:$0xf]
        %v570 = vld [vmem:[#allocation10 + $0x1c] sm:$0xf]
        %v571 = vld [vmem:[#allocation10 + $0x20] sm:$0xf]
        %v572 = vld [vmem:[#allocation10 + $0x24] sm:$0xf]
        %v573 = vld [vmem:[#allocation10 + $0x28] sm:$0xf]
        %v574 = vld [vmem:[#allocation10 + $0x2c] sm:$0xf]
        %v575 = vld [vmem:[#allocation10 + $0x30] sm:$0xf]
        %v576 = vld [vmem:[#allocation10 + $0x34] sm:$0xf]
        %v577 = vld [vmem:[#allocation10 + $0x38] sm:$0xf]
        %v578 = vld [vmem:[#allocation10 + $0x3c] sm:$0xf]
        %v579 = vld [vmem:[%s5] sm:$0x1]
        %v581 = vperm.slane %v579, 0
        %v599 = vunpack.c.l.b16 %v563
        %v600 = vunpack.c.l.b16 %v564
        %v601 = vunpack.c.l.b16 %v565
        %v602 = vunpack.c.l.b16 %v566
        %v603 = vunpack.c.l.b16 %v567
        %v604 = vunpack.c.l.b16 %v568
        %v605 = vunpack.c.l.b16 %v569
        %v606 = vunpack.c.l.b16 %v570
        %v607 = vunpack.c.l.b16 %v571
        %v608 = vunpack.c.l.b16 %v572
        %v609 = vunpack.c.l.b16 %v573
        %v610 = vunpack.c.l.b16 %v574
        %v611 = vunpack.c.l.b16 %v575
        %v612 = vunpack.c.l.b16 %v576
        %v613 = vunpack.c.l.b16 %v577
        %v614 = vunpack.c.l.b16 %v578
        %v615 = vpack.c.b16 %v600, %v599
        %v616 = vpack.c.b16 %v602, %v601
        %v617 = vpack.c.b16 %v604, %v603
        %v618 = vpack.c.b16 %v606, %v605
        %v619 = vpack.c.b16 %v608, %v607
        %v620 = vpack.c.b16 %v610, %v609
        %v621 = vpack.c.b16 %v612, %v611
        %v622 = vpack.c.b16 %v614, %v613
        %631 = vmatpush.bf16.msra.mxu0 %v622
        %632 = vmatpush.bf16.msra.mxu0 %v621
        %633 = vmatpush.bf16.msra.mxu0 %v620
        %634 = vmatpush.bf16.msra.mxu0 %v619
        %635 = vmatpush.bf16.msra.mxu0 %v618
        %636 = vmatpush.bf16.msra.mxu0 %v617
        %637 = vmatpush.bf16.msra.mxu0 %v616
        %638 = vmatpush.bf16.msra.mxu0 %v615
        %639 = vmatmul.bf16.gmra.mxu0 %v562
        %v640 = vpop.f32.mrf.mxu0
        %v641 = vadd.f32 %v581, %v640
        %v642 = vpop.f32.mrf.mxu0
        %v643 = vadd.f32 %v581, %v642
        %644 = vdwg.mxu0
        %v645 = vxor.u32 %v641, 2147483648
        %v646 = vxor.u32 %v643, 2147483648
        %v647 = vmul.f32 %v645, 1.442695
        %v648 = vpow.pop %v647
        %v649 = vmul.f32 %v646, 1.442695
        %v650 = vpow.pop %v649
        %v651 = vadd.f32 %v648, 1.0
        %v652 = vadd.f32 %v650, 1.0
        %v653 = vrcp.pop %v651
        %v654 = vmul.f32 %v651, %v653
        %v655 = vsub.f32 1.0, %v654
        %v656 = vmul.f32 %v653, %v655
        %v657 = vadd.f32 %v653, %v656
        %vm658 = vweird.f32 %v651
        %vm659 = vweird.f32 %v653
        %vm660 = vmor %vm658, %vm659
        %v661 = vsel %vm660, %v653, %v657
        %v662 = vand.u32 2147483647, %v651
        %vm663 = vcmp.eq.f32.partialorder %v662, 8.507059e+37
        %v664 = vand.u32 %v651, 2147483648
        %v665 = vor.u32 1.1754944e-38, %v664
        %v666 = vsel %vm663, %v665, %v661
        %v667 = vmul.f32 1.0, %v666
        %v668 = vrcp.pop %v652
        %v669 = vmul.f32 %v652, %v668
        %v670 = vsub.f32 1.0, %v669
        %v671 = vmul.f32 %v668, %v670
        %v672 = vadd.f32 %v668, %v671
        %vm673 = vweird.f32 %v652
        %vm674 = vweird.f32 %v668
        %vm675 = vmor %vm673, %vm674
        %v676 = vsel %vm675, %v668, %v672
        %v677 = vand.u32 2147483647, %v652
        %vm678 = vcmp.eq.f32.partialorder %v677, 8.507059e+37
        %v679 = vand.u32 %v652, 2147483648
        %v680 = vor.u32 1.1754944e-38, %v679
        %v681 = vsel %vm678, %v680, %v676
        %v682 = vmul.f32 1.0, %v681
        %v683 = vmul.f32 %v641, %v667
        %v684 = vmul.f32 %v643, %v682
        %v685 = vadd.f32 %v683, %v440
        %v686 = vadd.f32 %v684, %v441
        %687 = vst [vmem:[%s429] sm:$0xff] %v685
        %688 = vst [vmem:[%s429 + $0x8] sm:$0xff] %v686
        %s689 = sand.u32 %s212, 1
        %s690 = scalar_lea.sflag [#allocation4], %s689
        %s691 = sand.u32 %s212, 1
        %s692 = smul.addr %s691, 16
        %s693 = scalar_lea.vmem [#allocation11], %s692
        // Predicated region
        $region65: #{tpu_custom_call.1} parent=43 // pred_check
          %p694 = pneg %p222
        $region66: #{tpu_custom_call.1} parent=43 // pred_check_branch
          %696 = sbr.rel (%p694) target = $region68
        $region67: #{tpu_custom_call.1} parent=43 // pred_region
          %s697 = smul.u32 2, %s32
          %699 = vsyncadd %s690, 0
          %s700 = smul.addr %s31, 2
          %s701 = sadd.s32 %s697, %s700
          %s702 = smul.addr %s701, 8
          %s703 = scalar_lea.hbm %s6, %s702
          %s704 = sshll.u32 %s693, 4
          %s705 = int_to_ptr.vmem [resolvable:$true] %s704
          %s706 = sshll.u32 %s703, 4
          %s707 = int_to_ptr.hbm [resolvable:$true] %s706
          %712 = dma.vmem_to_hbm [thread:$0]  %s705, 256, %s707, %s690, 128, 128, 8
        $region68: #{tpu_custom_call.1} parent=43 // pred_fallthru
          _
      $region44: #{tpu_custom_call.1} parent=5 // pred_fallthru
        _
      %p713 = scmp.le.s32.totalorder 2, %s22
      // Predicated region
      $region69: #{tpu_custom_call.1} parent=5 // pred_check
        %p714 = pneg %p713
      $region70: #{tpu_custom_call.1} parent=5 // pred_check_branch
        %716 = sbr.rel (%p714) target = $region72
      $region71: #{tpu_custom_call.1} parent=5 // pred_region
        %s717 = ssub.s32 %s22, 2
        // Predicated region
        $region73: #{tpu_custom_call.1} parent=71 // pred_check
          %p718 = pneg %p228
        $region74: #{tpu_custom_call.1} parent=71 // pred_check_branch
          %720 = sbr.rel (%p718) target = $region76
        $region75: #{tpu_custom_call.1} parent=71 // pred_region
          %s721 = sand.u32 %s213, 1
          %s722 = scalar_lea.sflag [#allocation4], %s721
          %s723 = sand.u32 %s213, 1
          %s724 = smul.addr %s723, 16
          %s725 = scalar_lea.vmem [#allocation11], %s724
          %727 = dma.done %s722, 256
        $region76: #{tpu_custom_call.1} parent=71 // pred_fallthru
          _
      $region72: #{tpu_custom_call.1} parent=5 // pred_fallthru
        _
    $region6: #{tpu_custom_call.1} parent=1 // loop_footer
      %s26 = sadd.s32 1, %s22
    $region7: #{tpu_custom_call.1} parent=1 // loop_footer_branch
      %21 = sbr.rel target = $region3
    $region8: #{tpu_custom_call.1} parent=1 // loop_exit
      _
    %728 = vsyncpa [#allocation3], 1
    %s729 = scalar_lea.sflag [#allocation3], 1
    %730 = vsyncpa %s729, 1
    %731 = vsyncpa [#allocation6], 1
    %s732 = scalar_lea.sflag [#allocation6], 1
    %733 = vsyncpa %s732, 1
    %734 = vsyncpa [#allocation9], 1
    %735 = vsyncpa [#allocation4], 1
    %s736 = scalar_lea.sflag [#allocation4], 1
    %737 = vsyncpa %s736, 1

</llo_original>
